<compile_context>
chip_gen: v7x
topology: tpu7x:2x2x1
jax: 0.10.0
libtpu: 0.0.40
codegen_flags: <defaults>
</compile_context>

<pallas_src>
import jax
import jax.numpy as jnp
from jax.experimental import pallas as pl
from jax.experimental.pallas import tpu as pltpu


def seq_pool_kernel(x_ref, o_ref):
    # x_ref: (2*t_tile, B, D) time-major input slab
    # o_ref: (t_tile, B, 2*D) time-major output slab
    to, b, d2 = o_ref.shape
    d = d2 // 2
    # Leading-dim regroup only (last two dims untouched) => cheap slab
    # re-indexing in vregs, no cross-lane / cross-sublane movement.
    x = x_ref[...].reshape(to, 2, b, d)
    # Two direct half-width stores; no concatenated full-block temporary.
    o_ref[:, :, :d] = x[:, 0, :, :]   # timesteps 2t
    o_ref[:, :, d:] = x[:, 1, :, :]   # timesteps 2t + 1


def _vmem_limits():
    """(scoped vmem_limit_bytes, tile-sizing budget) derived from the chip."""
    try:
        cap = pltpu.get_tpu_info().vmem_capacity_bytes
    except Exception:
        cap = 64 << 20  # conservative fallback (v7x-sized)
    # ~96 MiB scoped on 128 MiB parts (v5e/v6e), ~48 MiB on 64 MiB parts (v7x)
    limit = int(min(cap * 3 // 4, 96 << 20))
    budget = int(limit * 3 // 4)  # headroom for in-kernel temps / internal scratch
    return limit, budget


def _divisors(n):
    ds, i = set(), 1
    while i * i <= n:
        if n % i == 0:
            ds.add(i)
            ds.add(n // i)
        i += 1
    return sorted(ds)


def _choose_t_tile(To, B, D, itemsize, tile_budget_bytes):
    """Largest divisor of To whose double-buffered in+out blocks fit the budget,
    preferring >= 4 grid steps (pipelining) with an even step count (v7x TCs)."""
    per_t = 8 * B * D * itemsize  # 2x input block + 2x output block bytes per output timestep
    max_t = max(1, tile_budget_bytes // per_t)
    cands = [t for t in _divisors(To) if t <= max_t]
    if not cands:
        return 1
    for pred in (
        lambda t: To // t >= 4 and (To // t) % 2 == 0,  # >=4 steps, even count
        lambda t: To // t >= 4,                          # >=4 steps
        lambda t: To // t >= 2,                          # at least some overlap
        lambda t: True,
    ):
        sel = [t for t in cands if pred(t)]
        if sel:
            return max(sel)
    return 1


def sequence_pooling(x_padded, lens):
    """x_padded: (T, B, D) time-major padded batch (pad_packed_sequence layout).
    lens: (B,) int32 valid lengths.
    Returns (out_padded, new_lens): out_padded is (T//2, B, 2*D) time-major,
    new_lens = lens // 2 (the repacked lengths)."""
    T, B, D = x_padded.shape
    To = T // 2
    new_lens = lens // 2
    if To == 0:
        return jnp.zeros((0, B, 2 * D), x_padded.dtype), new_lens

    itemsize = jnp.dtype(x_padded.dtype).itemsize
    vmem_limit, tile_budget = _vmem_limits()
    t_tile = _choose_t_tile(To, B, D, itemsize, tile_budget)
    grid = (To // t_tile,)

    out = pl.pallas_call(
        seq_pool_kernel,
        out_shape=jax.ShapeDtypeStruct((To, B, 2 * D), x_padded.dtype),
        grid_spec=pltpu.PrefetchScalarGridSpec(
            num_scalar_prefetch=0,
            grid=grid,
            # Contiguous leading-dim window; covers exactly rows [0, 2*To),
            # dropping an odd trailing timestep for free.
            in_specs=[pl.BlockSpec((2 * t_tile, B, D), lambda t: (t, 0, 0))],
            out_specs=pl.BlockSpec((t_tile, B, 2 * D), lambda t: (t, 0, 0)),
        ),
        compiler_params=pltpu.CompilerParams(
            dimension_semantics=("parallel",),  # independent time tiles; v7x splits them
            vmem_limit_bytes=vmem_limit,
        ),
        cost_estimate=pl.CostEstimate(
            flops=0,
            transcendentals=0,
            bytes_accessed=4 * To * B * D * itemsize,  # read 2*To*B*D + write To*B*2*D
        ),
    )(x_padded)

    # Padded region beyond new_lens may hold [last valid step, 0] pairs for
    # odd per-sequence lengths -- same as PyTorch before repacking; lens // 2
    # makes repacking ignore it.
    return out, new_lens


if __name__ == "__main__":
    key = jax.random.PRNGKey(0)

    def run_case(T, B, D, lens_list):
        k = jax.random.fold_in(key, T * 1000 + B * 10 + D)
        x = jax.random.normal(k, (T, B, D), dtype=jnp.float32)
        lens = jnp.array(lens_list, dtype=jnp.int32)
        # emulate pad_packed_sequence output: zero the padded region
        mask = (jnp.arange(T)[:, None] < lens[None, :]).astype(x.dtype)[:, :, None]
        x = x * mask

        out, new_lens = sequence_pooling(x, lens)
        out = jax.block_until_ready(out)

        # pure-JAX reference of the PyTorch forward (batch-major view == pair concat)
        To = T // 2
        xb = jnp.transpose(x, (1, 0, 2))[:, : 2 * To, :]          # (B, 2*To, D)
        ref = jnp.transpose(xb.reshape(B, To, 2 * D), (1, 0, 2))  # (To, B, 2*D)
        assert out.shape == (To, B, 2 * D)
        assert jnp.array_equal(out, ref)
        assert [int(v) for v in new_lens] == [l // 2 for l in lens_list]

    run_case(8, 2, 32, [8, 6])          # even T (module-sized small test)
    run_case(7, 2, 32, [7, 5])          # odd T: trailing timestep dropped via window
    run_case(64, 8, 128, [64] * 8)      # multi-step time-tiled grid (4 steps)
    print("KERNEL_OK")
</pallas_src>

<mosaic_0001>
module attributes {stable_mosaic.version = 11 : i64} {
  func.func @seq_pool_kernel(%arg0: i32, %arg1: memref<2x2x32xf32, #tpu.memory_space<vmem>>, %arg2: memref<1x2x64xf32, #tpu.memory_space<vmem>>) attributes {dimension_semantics = [#tpu.dimension_semantics<parallel>], iteration_bounds = array<i64: 4>, scalar_prefetch = 0 : i64, scratch_operands = 0 : i64, tpu.core_type = #tpu.core_type<tc>, window_params = [{transform_indices = @transform_0, window_bounds = array<i64: 2, 2, 32>}, {transform_indices = @transform_1, window_bounds = array<i64: 1, 2, 64>}]} {
    %c0 = arith.constant 0 : index
    %c0_0 = arith.constant 0 : index
    %c0_1 = arith.constant 0 : index
    %0 = vector.load %arg1[%c0, %c0_0, %c0_1] : memref<2x2x32xf32, #tpu.memory_space<vmem>>, vector<2x2x32xf32>
    %1 = vector.shape_cast %0 : vector<2x2x32xf32> to vector<1x2x2x32xf32>
    %2 = vector.extract_strided_slice %1 {offsets = [0, 0, 0, 0], sizes = [1, 1, 2, 32], strides = [1, 1, 1, 1]} : vector<1x2x2x32xf32> to vector<1x1x2x32xf32>
    %3 = vector.shape_cast %2 : vector<1x1x2x32xf32> to vector<1x2x32xf32>
    %c0_2 = arith.constant 0 : index
    %c0_3 = arith.constant 0 : index
    %c0_4 = arith.constant 0 : index
    %4 = vector.load %arg2[%c0_2, %c0_3, %c0_4] : memref<1x2x64xf32, #tpu.memory_space<vmem>>, vector<1x2x32xf32>
    tpu.vector_store %arg2[%c0_2, %c0_3, %c0_4], %3 {strides = array<i32>} : memref<1x2x64xf32, #tpu.memory_space<vmem>>, vector<1x2x32xf32>,
    %5 = vector.extract_strided_slice %1 {offsets = [0, 1, 0, 0], sizes = [1, 1, 2, 32], strides = [1, 1, 1, 1]} : vector<1x2x2x32xf32> to vector<1x1x2x32xf32>
    %6 = vector.shape_cast %5 : vector<1x1x2x32xf32> to vector<1x2x32xf32>
    %c0_5 = arith.constant 0 : index
    %c0_6 = arith.constant 0 : index
    %c32 = arith.constant 32 : index
    %7 = vector.load %arg2[%c0_5, %c0_6, %c32] : memref<1x2x64xf32, #tpu.memory_space<vmem>>, vector<1x2x32xf32>
    tpu.vector_store %arg2[%c0_5, %c0_6, %c32], %6 {strides = array<i32>} : memref<1x2x64xf32, #tpu.memory_space<vmem>>, vector<1x2x32xf32>,
    return
  }
  func.func @transform_0(%arg0: i32) -> (i32, i32, i32) {
    %c0_i32 = arith.constant 0 : i32
    %c0_i32_0 = arith.constant 0 : i32
    %c0_i32_1 = arith.constant 0 : i32
    return %arg0, %c0_i32, %c0_i32_0 : i32, i32, i32
  }
  func.func @transform_1(%arg0: i32) -> (i32, i32, i32) {
    %c0_i32 = arith.constant 0 : i32
    %c0_i32_0 = arith.constant 0 : i32
    %c0_i32_1 = arith.constant 0 : i32
    return %arg0, %c0_i32, %c0_i32_0 : i32, i32, i32
  }
}

</mosaic_0001>

<llo_original>
// kernel: tpu_custom_call.1
$region0: #{tpu_custom_call.1}
  #allocation0 [shape = 'u32[]', space=smem, size = 0x4, offset = 0x4, fixed_abs, tag = 'smem constant byte address 0x4 - core index']
  #allocation1 [shape = 'u32[144,128]{1,0:T(1,128)}', space=vmem, size = 0x12000, scoped, tag = 'internal scratch']
  %s0 = inlined_call_operand.hbm [shape: f32[8,2,32], index: 0, kind: input, shape index: {}]
  %s1 = inlined_call_operand.hbm [shape: f32[4,2,64], index: 1, kind: output, shape index: {}]
  %s2 = sld [smem:[#allocation0]]
  $region41: #{tpu_custom_call.1} parent=0
    _
  %s4 = ssub.s32 1, %s2
  %s5 = scalar_select 0, %s4, %s2
  $region1: #{tpu_custom_call.1} parent=0
    #allocation2 [shape = 'u8[4096]{0}', space=vmem, size = 0x1000, scoped, tag = 'input window, operand 0']
    #allocation3 [shape = 's32[2]{0}', space=sflag, size = 0x8, scoped, tag = 'scoped memory for tpu_custom_call.1']
    #allocation4 [shape = 's32[2]{0}', space=sflag, size = 0x8, scoped, tag = 'scoped memory for tpu_custom_call.1']
    #allocation5 [shape = 'u8[2048]{0}', space=vmem, size = 0x800, scoped, tag = 'output window, operand 0']
    %6 = vsyncpa [#allocation3], 0
    %s7 = scalar_lea.sflag [#allocation3], 1
    %8 = vsyncpa %s7, 0
    %9 = vsyncpa [#allocation4], 0
    %s10 = scalar_lea.sflag [#allocation4], 1
    %11 = vsyncpa %s10, 0
    loop: start=0, step=1, limit=6
    $region2: #{tpu_custom_call.1} parent=1 // loop_pre_header
      _
    $region3: #{tpu_custom_call.1} parent=1 // loop_header
      %s13 = sphi 0, %s17
      %p14 = scmp.ge.s32.totalorder %s13, 6
      %s23 = sphi 0, %s25
      %s26 = sphi 0, %s23
      %s27 = sphi 0, %s26
      %s43 = sphi 0, %s27
      %s49 = sphi 0, %s51
      %s52 = sphi 0, %s49
      %s53 = sphi 0, %s52
      %s69 = sphi 0, %s53
    $region4: #{tpu_custom_call.1} parent=1 // loop_header_branch
      %16 = sbr.rel (%p14) target = $region8
    $region5: #{tpu_custom_call.1} parent=1 // loop_body
      %s18 = ssub.s32 %s13, 1
      %s19 = ssub.s32 %s13, 2
      %s20 = sadd.s32 %s13, 1
      %s21 = ssub.s32 %s13, %s20
      %p22 = scmp.eq.s32.totalorder %s21, 0
      %s24 = sadd.s32 %s23, 1
      %s25 = scalar_select %p22, %s23, %s24
      %p28 = pneg %p22
      %p29 = scmp.eq.s32.totalorder %s13, 3
      %p30 = por %p28, %p29
      %p31 = scmp.ne.s32.totalorder %s23, %s26
      %p32 = scmp.eq.s32.totalorder %s13, 0
      %p33 = por %p31, %p32
      %p34 = scmp.ne.s32.totalorder %s23, %s26
      %p35 = scmp.eq.s32.totalorder %s18, 3
      %p36 = por %p34, %p35
      %p37 = scmp.ne.s32.totalorder %s26, %s27
      %p38 = scmp.eq.s32.totalorder %s18, 0
      %p39 = por %p37, %p38
      %p40 = scmp.ne.s32.totalorder %s26, %s27
      %p41 = scmp.eq.s32.totalorder %s19, 3
      %p42 = por %p40, %p41
      %p44 = scmp.ne.s32.totalorder %s27, %s43
      %p45 = scmp.eq.s32.totalorder %s19, 0
      %p46 = por %p44, %p45
      %s47 = ssub.s32 %s13, %s20
      %p48 = scmp.eq.s32.totalorder %s47, 0
      %s50 = sadd.s32 %s49, 1
      %s51 = scalar_select %p48, %s49, %s50
      %p54 = pneg %p48
      %p55 = scmp.eq.s32.totalorder %s13, 3
      %p56 = por %p54, %p55
      %p57 = scmp.ne.s32.totalorder %s49, %s52
      %p58 = scmp.eq.s32.totalorder %s13, 0
      %p59 = por %p57, %p58
      %p60 = scmp.ne.s32.totalorder %s49, %s52
      %p61 = scmp.eq.s32.totalorder %s18, 3
      %p62 = por %p60, %p61
      %p63 = scmp.ne.s32.totalorder %s52, %s53
      %p64 = scmp.eq.s32.totalorder %s18, 0
      %p65 = por %p63, %p64
      %p66 = scmp.ne.s32.totalorder %s52, %s53
      %p67 = scmp.eq.s32.totalorder %s19, 3
      %p68 = por %p66, %p67
      %p70 = scmp.ne.s32.totalorder %s53, %s69
      %p71 = scmp.eq.s32.totalorder %s19, 0
      %p72 = por %p70, %p71
      %p73 = scmp.le.s32.totalorder 1, %s13
      %p74 = scmp.lt.s32.totalorder %s13, 5
      %p75 = pnand %p73, %p74
      %p76 = pneg %p75
      // Predicated region
      $region9: #{tpu_custom_call.1} parent=5 // pred_check
        _
      $region10: #{tpu_custom_call.1} parent=5 // pred_check_branch
        %78 = sbr.rel (%p75) target = $region12
      $region11: #{tpu_custom_call.1} parent=5 // pred_region
        %s79 = ssub.s32 %s13, 1
      $region12: #{tpu_custom_call.1} parent=5 // pred_fallthru
        _
      %p80 = scmp.lt.s32.totalorder %s13, 4
      // Predicated region
      $region13: #{tpu_custom_call.1} parent=5 // pred_check
        %p81 = pneg %p80
      $region14: #{tpu_custom_call.1} parent=5 // pred_check_branch
        %83 = sbr.rel (%p81) target = $region16
      $region15: #{tpu_custom_call.1} parent=5 // pred_region
        // Predicated region
        $region17: #{tpu_custom_call.1} parent=15 // pred_check
          %p84 = pneg %p33
        $region18: #{tpu_custom_call.1} parent=15 // pred_check_branch
          %86 = sbr.rel (%p84) target = $region20
        $region19: #{tpu_custom_call.1} parent=15 // pred_region
          %s87 = sand.u32 %s23, 1
          %s88 = scalar_lea.sflag [#allocation3], %s87
          %s89 = sand.u32 %s23, 1
          %s90 = smul.addr %s89, 4
          %s91 = scalar_lea.vmem [#allocation2], %s90
          %s92 = smul.u32 2, %s13
          %s94 = ssub.s32 64, 64
          %95 = vsyncadd %s88, %s94
          %s96 = smul.addr %s92, 32
          %s97 = scalar_lea.hbm %s0, %s96
          %s98 = sshll.u32 %s91, 4
          %s99 = int_to_ptr.vmem [resolvable:$true] %s98
          %104 = dma.hbm_to_vmem [thread:$0]  %s97, 64, %s99, %s88, 32, 32, 2
        $region20: #{tpu_custom_call.1} parent=15 // pred_fallthru
          _
      $region16: #{tpu_custom_call.1} parent=5 // pred_fallthru
        _
      %p105 = scmp.le.s32.totalorder 1, %s13
      %p106 = scmp.lt.s32.totalorder %s13, 5
      %p107 = pnand %p105, %p106
      %p108 = pneg %p107
      // Predicated region
      $region21: #{tpu_custom_call.1} parent=5 // pred_check
        _
      $region22: #{tpu_custom_call.1} parent=5 // pred_check_branch
        %110 = sbr.rel (%p107) target = $region24
      $region23: #{tpu_custom_call.1} parent=5 // pred_region
        %s111 = ssub.s32 %s13, 1
        %s112 = sand.u32 %s26, 1
        %s113 = scalar_lea.sflag [#allocation3], %s112
        %s114 = sand.u32 %s26, 1
        %s115 = smul.addr %s114, 4
        %s116 = scalar_lea.vmem [#allocation2], %s115
        // Predicated region
        $region25: #{tpu_custom_call.1} parent=23 // pred_check
          %p117 = pneg %p39
        $region26: #{tpu_custom_call.1} parent=23 // pred_check_branch
          %119 = sbr.rel (%p117) target = $region28
        $region27: #{tpu_custom_call.1} parent=23 // pred_region
          %120 = dma.done %s113, 64
        $region28: #{tpu_custom_call.1} parent=23 // pred_fallthru
          _
        %s121 = sand.u32 %s26, 1
        %s122 = scalar_lea.sflag [#allocation3], %s121
        %s123 = sand.u32 %s26, 1
        %s124 = smul.addr %s123, 4
        %s125 = scalar_lea.vmem [#allocation2], %s124
        %p126 = pneg %p39
        %p127 = pneg %p36
        %p128 = pneg %p65
        %p129 = pneg %p62
        %s130 = sand.u32 %s52, 1
        %s131 = scalar_lea.sflag [#allocation4], %s130
        %s132 = sand.u32 %s52, 1
        %s133 = smul.addr %s132, 2
        %s134 = scalar_lea.vmem [#allocation5], %s133
        %s135 = smul.u32 2, %s18
        %v136 = vld [vmem:[%s116] sm:$0x3]
        %v137 = vld [vmem:[%s116 + $0x2] sm:$0x3]
        %vm138 = vcmask 254976
        %139 = vst.msk [vmem:[%s134] sm:$0x3] %vm138, %v136
        %141 = vrot.lane.b32.xlu0 %v137, 32
        %v142 = vpop.permute.xlu0 %141
        %vm144 = vcmask 517376
        %145 = vst.msk [vmem:[%s134] sm:$0x3] %vm144, %v142
        %s146 = sand.u32 %s52, 1
        %s147 = scalar_lea.sflag [#allocation4], %s146
        %s148 = sand.u32 %s52, 1
        %s149 = smul.addr %s148, 2
        %s150 = scalar_lea.vmem [#allocation5], %s149
        // Predicated region
        $region29: #{tpu_custom_call.1} parent=23 // pred_check
          %p151 = pneg %p62
        $region30: #{tpu_custom_call.1} parent=23 // pred_check_branch
          %153 = sbr.rel (%p151) target = $region32
        $region31: #{tpu_custom_call.1} parent=23 // pred_region
          %s155 = ssub.s32 32, 32
          %156 = vsyncadd %s147, %s155
          %s157 = smul.addr %s18, 32
          %s158 = scalar_lea.hbm %s1, %s157
          %s160 = sshll.u32 %s150, 4
          %s161 = int_to_ptr.vmem [resolvable:$true] %s160
          %163 = dma.vmem_to_hbm [thread:$0]  %s161, 32, %s158, %s147
        $region32: #{tpu_custom_call.1} parent=23 // pred_fallthru
          _
      $region24: #{tpu_custom_call.1} parent=5 // pred_fallthru
        _
      %p164 = scmp.le.s32.totalorder 2, %s13
      // Predicated region
      $region33: #{tpu_custom_call.1} parent=5 // pred_check
        %p165 = pneg %p164
      $region34: #{tpu_custom_call.1} parent=5 // pred_check_branch
        %167 = sbr.rel (%p165) target = $region36
      $region35: #{tpu_custom_call.1} parent=5 // pred_region
        %s168 = ssub.s32 %s13, 2
        // Predicated region
        $region37: #{tpu_custom_call.1} parent=35 // pred_check
          %p169 = pneg %p68
        $region38: #{tpu_custom_call.1} parent=35 // pred_check_branch
          %171 = sbr.rel (%p169) target = $region40
        $region39: #{tpu_custom_call.1} parent=35 // pred_region
          %s172 = sand.u32 %s53, 1
          %s173 = scalar_lea.sflag [#allocation4], %s172
          %s174 = sand.u32 %s53, 1
          %s175 = smul.addr %s174, 2
          %s176 = scalar_lea.vmem [#allocation5], %s175
          %177 = dma.done %s173, 32
        $region40: #{tpu_custom_call.1} parent=35 // pred_fallthru
          _
      $region36: #{tpu_custom_call.1} parent=5 // pred_fallthru
        _
    $region6: #{tpu_custom_call.1} parent=1 // loop_footer
      %s17 = sadd.s32 1, %s13
    $region7: #{tpu_custom_call.1} parent=1 // loop_footer_branch
      %12 = sbr.rel target = $region3
    $region8: #{tpu_custom_call.1} parent=1 // loop_exit
      _
    %178 = vsyncpa [#allocation3], 1
    %s179 = scalar_lea.sflag [#allocation3], 1
    %180 = vsyncpa %s179, 1
    %181 = vsyncpa [#allocation4], 1
    %s182 = scalar_lea.sflag [#allocation4], 1
    %183 = vsyncpa %s182, 1

</llo_original>
